<compile_context>
chip_gen: v7x
topology: tpu7x:2x2x1
jax: 0.10.0
libtpu: 0.0.40
codegen_flags: <defaults>
</compile_context>

<pallas_src>
import functools

import jax
import jax.numpy as jnp
from jax.experimental import pallas as pl
from jax.experimental.pallas import tpu as pltpu

ALPHA = 1.0
GAMMA = 2.0  # implemented as an explicit square below
LANES = 128
SUBLANES = 8
ROW_TILE_MAX = 1024  # rows per grid step (multiple of 8); 512 KiB f32 per input


def _focal_loss_kernel(x_ref, t_ref, out_ref, *, n_valid, row_tile, need_mask):
    i = pl.program_id(0)

    p = x_ref[...].astype(jnp.float32)
    t = t_ref[...].astype(jnp.float32)

    # binary_cross_entropy (reduction='none'), PyTorch clamps log at -100.
    log_p = jnp.maximum(jnp.log(p), -100.0)
    log_1mp = jnp.maximum(jnp.log(1.0 - p), -100.0)
    bce = -(t * log_p + (1.0 - t) * log_1mp)

    pt = jnp.exp(-bce)
    d = 1.0 - pt
    f_loss = ALPHA * (d * d) * bce  # explicit square instead of ** GAMMA

    if need_mask:
        # Zero out padded / out-of-range elements (flat index >= n_valid).
        row_ids = jax.lax.broadcasted_iota(jnp.int32, (row_tile, LANES), 0)
        lane_ids = jax.lax.broadcasted_iota(jnp.int32, (row_tile, LANES), 1)
        flat_idx = (i * row_tile + row_ids) * LANES + lane_ids
        f_loss = jnp.where(flat_idx < n_valid, f_loss, 0.0)

    # Per-block partial sum: reduce only across sublane groups (VPU adds),
    # leaving a lane-dense (8, 128) partial. Cross-lane reduce happens outside.
    out_ref[...] = f_loss.reshape(row_tile // SUBLANES, SUBLANES, LANES).sum(axis=0)


def focal_loss(inputs, targets):
    """Focal loss with reduce=True (scalar mean), matching the PyTorch module."""
    n_valid = inputs.size
    flat_x = inputs.reshape(-1).astype(jnp.float32)
    flat_t = targets.reshape(-1).astype(jnp.float32)

    # Minimal pad (at most 1023 elements) so the flat array reshapes to
    # (rows, 128) with rows a multiple of 8. Padded values are masked in-kernel.
    pad_unit = SUBLANES * LANES
    padded = pl.cdiv(n_valid, pad_unit) * pad_unit
    if padded != n_valid:
        flat_x = jnp.pad(flat_x, (0, padded - n_valid))
        flat_t = jnp.pad(flat_t, (0, padded - n_valid))

    rows = padded // LANES
    row_tile = min(ROW_TILE_MAX, rows)  # both are multiples of 8
    blocks = pl.cdiv(rows, row_tile)

    x2d = flat_x.reshape(rows, LANES)
    t2d = flat_t.reshape(rows, LANES)

    # Static check: mask only if there are padded elements or a partial tail block.
    need_mask = (padded != n_valid) or (rows % row_tile != 0)

    kernel = functools.partial(
        _focal_loss_kernel, n_valid=n_valid, row_tile=row_tile, need_mask=need_mask
    )

    partials = pl.pallas_call(
        kernel,
        out_shape=jax.ShapeDtypeStruct((blocks * SUBLANES, LANES), jnp.float32),
        grid_spec=pltpu.PrefetchScalarGridSpec(
            num_scalar_prefetch=0,
            grid=(blocks,),
            in_specs=[
                pl.BlockSpec((row_tile, LANES), lambda i: (i, 0)),
                pl.BlockSpec((row_tile, LANES), lambda i: (i, 0)),
            ],
            out_specs=pl.BlockSpec((SUBLANES, LANES), lambda i: (i, 0)),
        ),
        compiler_params=pltpu.CompilerParams(
            dimension_semantics=("parallel",),
        ),
    )(x2d, t2d)

    # Tiny final reduce (blocks*8 x 128 f32) + mean normalization outside kernel.
    return jnp.sum(partials) / jnp.float32(n_valid)


def _focal_loss_ref(inputs, targets):
    p = inputs.astype(jnp.float32)
    t = targets.astype(jnp.float32)
    log_p = jnp.maximum(jnp.log(p), -100.0)
    log_1mp = jnp.maximum(jnp.log(1.0 - p), -100.0)
    bce = -(t * log_p + (1.0 - t) * log_1mp)
    pt = jnp.exp(-bce)
    f_loss = ALPHA * (1.0 - pt) ** GAMMA * bce
    return jnp.mean(f_loss)


if __name__ == "__main__":
    key = jax.random.PRNGKey(0)
    k1, k2, k3, k4 = jax.random.split(key, 4)

    # NCHW-shaped example, probabilities in (0, 1) since logits=False.
    x = jax.nn.sigmoid(jax.random.normal(k1, (2, 4, 16, 16), dtype=jnp.float32))
    t = (jax.random.uniform(k2, (2, 4, 16, 16)) > 0.5).astype(jnp.float32)

    loss = jax.block_until_ready(focal_loss(x, t))
    ref = jax.block_until_ready(_focal_loss_ref(x, t))
    assert jnp.allclose(loss, ref, atol=1e-5, rtol=1e-5), (loss, ref)

    # Non-128-aligned shape to exercise the in-kernel tail masking path.
    x2 = jax.nn.sigmoid(jax.random.normal(k3, (2, 3, 7, 5), dtype=jnp.float32))
    t2 = (jax.random.uniform(k4, (2, 3, 7, 5)) > 0.5).astype(jnp.float32)

    loss2 = jax.block_until_ready(focal_loss(x2, t2))
    ref2 = jax.block_until_ready(_focal_loss_ref(x2, t2))
    assert jnp.allclose(loss2, ref2, atol=1e-5, rtol=1e-5), (loss2, ref2)

    print("KERNEL_OK")
</pallas_src>

<mosaic_0001>
module attributes {stable_mosaic.version = 11 : i64} {
  func.func @_focal_loss_kernel(%arg0: i32, %arg1: memref<16x128xf32, #tpu.memory_space<vmem>>, %arg2: memref<16x128xf32, #tpu.memory_space<vmem>>, %arg3: memref<8x128xf32, #tpu.memory_space<vmem>>) attributes {dimension_semantics = [#tpu.dimension_semantics<parallel>], iteration_bounds = array<i64: 1>, scalar_prefetch = 0 : i64, scratch_operands = 0 : i64, tpu.core_type = #tpu.core_type<tc>, window_params = [{transform_indices = @transform_0, window_bounds = array<i64: 16, 128>}, {transform_indices = @transform_1, window_bounds = array<i64: 16, 128>}, {transform_indices = @transform_2, window_bounds = array<i64: 8, 128>}]} {
    %c0 = arith.constant 0 : index
    %c0_0 = arith.constant 0 : index
    %0 = vector.load %arg1[%c0, %c0_0] : memref<16x128xf32, #tpu.memory_space<vmem>>, vector<16x128xf32>
    %c0_1 = arith.constant 0 : index
    %c0_2 = arith.constant 0 : index
    %1 = vector.load %arg2[%c0_1, %c0_2] : memref<16x128xf32, #tpu.memory_space<vmem>>, vector<16x128xf32>
    %2 = math.log %0 : vector<16x128xf32>
    %cst = arith.constant -1.000000e+02 : f32
    %3 = vector.broadcast %cst : f32 to vector<16x128xf32>
    %4 = arith.maximumf %2, %3 : vector<16x128xf32>
    %cst_3 = arith.constant 1.000000e+00 : f32
    %5 = vector.broadcast %cst_3 : f32 to vector<16x128xf32>
    %6 = arith.subf %5, %0 : vector<16x128xf32>
    %7 = math.log %6 : vector<16x128xf32>
    %cst_4 = arith.constant -1.000000e+02 : f32
    %8 = vector.broadcast %cst_4 : f32 to vector<16x128xf32>
    %9 = arith.maximumf %7, %8 : vector<16x128xf32>
    %10 = arith.mulf %1, %4 : vector<16x128xf32>
    %cst_5 = arith.constant 1.000000e+00 : f32
    %11 = vector.broadcast %cst_5 : f32 to vector<16x128xf32>
    %12 = arith.subf %11, %1 : vector<16x128xf32>
    %13 = arith.mulf %12, %9 : vector<16x128xf32>
    %14 = arith.addf %10, %13 : vector<16x128xf32>
    %cst_6 = arith.constant 0.000000e+00 : f32
    %15 = vector.broadcast %cst_6 : f32 to vector<16x128xf32>
    %16 = arith.subf %15, %14 : vector<16x128xf32>
    %cst_7 = arith.constant 0.000000e+00 : f32
    %17 = vector.broadcast %cst_7 : f32 to vector<16x128xf32>
    %18 = arith.subf %17, %16 : vector<16x128xf32>
    %19 = math.exp %18 : vector<16x128xf32>
    %cst_8 = arith.constant 1.000000e+00 : f32
    %20 = vector.broadcast %cst_8 : f32 to vector<16x128xf32>
    %21 = arith.subf %20, %19 : vector<16x128xf32>
    %22 = arith.mulf %21, %21 : vector<16x128xf32>
    %cst_9 = arith.constant 1.000000e+00 : f32
    %23 = vector.broadcast %cst_9 : f32 to vector<16x128xf32>
    %24 = arith.mulf %23, %22 : vector<16x128xf32>
    %25 = arith.mulf %24, %16 : vector<16x128xf32>
    %26 = vector.shape_cast %25 : vector<16x128xf32> to vector<2x8x128xf32>
    %cst_10 = arith.constant dense<0.000000e+00> : vector<8x128xf32>
    %27 = vector.multi_reduction <add>, %26, %cst_10 [0] : vector<2x8x128xf32> to vector<8x128xf32>
    %c0_11 = arith.constant 0 : index
    %c0_12 = arith.constant 0 : index
    %28 = vector.load %arg3[%c0_11, %c0_12] : memref<8x128xf32, #tpu.memory_space<vmem>>, vector<8x128xf32>
    tpu.vector_store %arg3[%c0_11, %c0_12], %27 {strides = array<i32>} : memref<8x128xf32, #tpu.memory_space<vmem>>, vector<8x128xf32>,
    return
  }
  func.func @transform_0(%arg0: i32) -> (i32, i32) {
    %c0_i32 = arith.constant 0 : i32
    %c0_i32_0 = arith.constant 0 : i32
    return %arg0, %c0_i32 : i32, i32
  }
  func.func @transform_1(%arg0: i32) -> (i32, i32) {
    %c0_i32 = arith.constant 0 : i32
    %c0_i32_0 = arith.constant 0 : i32
    return %arg0, %c0_i32 : i32, i32
  }
  func.func @transform_2(%arg0: i32) -> (i32, i32) {
    %c0_i32 = arith.constant 0 : i32
    %c0_i32_0 = arith.constant 0 : i32
    return %arg0, %c0_i32 : i32, i32
  }
}

</mosaic_0001>

<llo_original>
// kernel: tpu_custom_call.1
$region0: #{tpu_custom_call.1}
  #allocation0 [shape = 'u32[]', space=smem, size = 0x4, offset = 0x4, fixed_abs, tag = 'smem constant byte address 0x4 - core index']
  #allocation1 [shape = 'u32[144,128]{1,0:T(1,128)}', space=vmem, size = 0x12000, scoped, tag = 'internal scratch']
  %s0 = inlined_call_operand.hbm [shape: f32[16,128], index: 0, kind: input, shape index: {}]
  %s1 = inlined_call_operand.hbm [shape: f32[16,128], index: 1, kind: input, shape index: {}]
  %s2 = inlined_call_operand.hbm [shape: f32[8,128], index: 2, kind: output, shape index: {}]
  %s3 = sld [smem:[#allocation0]]
  $region26: #{tpu_custom_call.1} parent=0
    _
  %s5 = ssub.s32 1, %s3
  %s6 = scalar_select 0, %s5, %s3
  $region1: #{tpu_custom_call.1} parent=0
    #allocation2 [shape = 'u8[8192]{0}', space=vmem, size = 0x2000, scoped, tag = 'input window, operand 0, single buffered']
    #allocation3 [shape = 's32[1]{0}', space=sflag, size = 0x4, scoped, tag = 'scoped memory for tpu_custom_call.1']
    #allocation4 [shape = 's32[1]{0}', space=sflag, size = 0x4, scoped, tag = 'scoped memory for tpu_custom_call.1']
    #allocation5 [shape = 'u8[8192]{0}', space=vmem, size = 0x2000, scoped, tag = 'input window, operand 1, single buffered']
    #allocation6 [shape = 's32[1]{0}', space=sflag, size = 0x4, scoped, tag = 'scoped memory for tpu_custom_call.1']
    #allocation7 [shape = 'u8[4096]{0}', space=vmem, size = 0x1000, scoped, tag = 'output window, operand 0, single buffered']
    %7 = vsyncpa [#allocation3], 0
    %8 = vsyncpa [#allocation6], 0
    %9 = vsyncpa [#allocation4], 0
    // Predicated region
    $region2: #{tpu_custom_call.1} parent=1 // pred_check
      _
    $region3: #{tpu_custom_call.1} parent=1 // pred_check_branch
      %11 = sbr.rel (0) target = $region5
    $region4: #{tpu_custom_call.1} parent=1 // pred_region
      %s13 = ssub.s32 256, 256
      %14 = vsyncadd [#allocation3], %s13
      %s15 = sshll.u32 [#allocation2], 4
      %s16 = int_to_ptr.vmem [resolvable:$true] %s15
      %21 = dma.hbm_to_vmem [thread:$0]  %s0, 256, %s16, [#allocation3], 128, 128, 8
    $region5: #{tpu_custom_call.1} parent=1 // pred_fallthru
      _
    // Predicated region
    $region6: #{tpu_custom_call.1} parent=1 // pred_check
      _
    $region7: #{tpu_custom_call.1} parent=1 // pred_check_branch
      %23 = sbr.rel (0) target = $region9
    $region8: #{tpu_custom_call.1} parent=1 // pred_region
      %s25 = ssub.s32 256, 256
      %26 = vsyncadd [#allocation6], %s25
      %s27 = sshll.u32 [#allocation5], 4
      %s28 = int_to_ptr.vmem [resolvable:$true] %s27
      %33 = dma.hbm_to_vmem [thread:$0]  %s1, 256, %s28, [#allocation6], 128, 128, 8
    $region9: #{tpu_custom_call.1} parent=1 // pred_fallthru
      _
    // Predicated region
    $region10: #{tpu_custom_call.1} parent=1 // pred_check
      _
    $region11: #{tpu_custom_call.1} parent=1 // pred_check_branch
      %35 = sbr.rel (0) target = $region13
    $region12: #{tpu_custom_call.1} parent=1 // pred_region
      %36 = dma.done [#allocation3], 256
    $region13: #{tpu_custom_call.1} parent=1 // pred_fallthru
      _
    // Predicated region
    $region14: #{tpu_custom_call.1} parent=1 // pred_check
      _
    $region15: #{tpu_custom_call.1} parent=1 // pred_check_branch
      %38 = sbr.rel (0) target = $region17
    $region16: #{tpu_custom_call.1} parent=1 // pred_region
      %39 = dma.done [#allocation6], 256
    $region17: #{tpu_custom_call.1} parent=1 // pred_fallthru
      _
    %v40 = vld [vmem:[#allocation2] sm:$0xff]
    %v41 = vld [vmem:[#allocation2 + $0x8] sm:$0xff]
    %v42 = vld [vmem:[#allocation5] sm:$0xff]
    %v43 = vld [vmem:[#allocation5 + $0x8] sm:$0xff]
    %v44 = vlog2.pop %v40
    %v45 = vmul.f32 %v44, 0.6931472
    %v46 = vlog2.pop %v41
    %v47 = vmul.f32 %v46, 0.6931472
    %v48 = vmax.f32 %v45, -100.0
    %v49 = vmax.f32 %v47, -100.0
    %v50 = vsub.f32 1.0, %v40
    %v51 = vsub.f32 1.0, %v41
    %v52 = vlog2.pop %v50
    %v53 = vmul.f32 %v52, 0.6931472
    %v54 = vlog2.pop %v51
    %v55 = vmul.f32 %v54, 0.6931472
    %v56 = vmax.f32 %v53, -100.0
    %v57 = vmax.f32 %v55, -100.0
    %v58 = vmul.f32 %v42, %v48
    %v59 = vmul.f32 %v43, %v49
    %v60 = vsub.f32 1.0, %v42
    %v61 = vsub.f32 1.0, %v43
    %v62 = vmul.f32 %v60, %v56
    %v63 = vmul.f32 %v61, %v57
    %v64 = vadd.f32 %v58, %v62
    %v65 = vadd.f32 %v59, %v63
    %v66 = vsub.f32 0.0, %v64
    %v67 = vsub.f32 0.0, %v65
    %v68 = vsub.f32 0.0, %v66
    %v69 = vsub.f32 0.0, %v67
    %v70 = vmul.f32 %v68, 1.442695
    %v71 = vpow.pop %v70
    %v72 = vmul.f32 %v69, 1.442695
    %v73 = vpow.pop %v72
    %v74 = vsub.f32 1.0, %v71
    %v75 = vsub.f32 1.0, %v73
    %v76 = vmul.f32 %v74, %v74
    %v77 = vmul.f32 %v75, %v75
    %v78 = vmul.f32 %v76, %v66
    %v79 = vmul.f32 %v77, %v67
    %v80 = vadd.f32 %v78, %v79
    %81 = vst [vmem:[#allocation7] sm:$0xff] %v80
    // Predicated region
    $region18: #{tpu_custom_call.1} parent=1 // pred_check
      _
    $region19: #{tpu_custom_call.1} parent=1 // pred_check_branch
      %83 = sbr.rel (0) target = $region21
    $region20: #{tpu_custom_call.1} parent=1 // pred_region
      %s85 = ssub.s32 128, 128
      %86 = vsyncadd [#allocation4], %s85
      %s88 = sshll.u32 [#allocation7], 4
      %s89 = int_to_ptr.vmem [resolvable:$true] %s88
      %91 = dma.vmem_to_hbm [thread:$0]  %s89, 128, %s2, [#allocation4]
    $region21: #{tpu_custom_call.1} parent=1 // pred_fallthru
      _
    // Predicated region
    $region22: #{tpu_custom_call.1} parent=1 // pred_check
      _
    $region23: #{tpu_custom_call.1} parent=1 // pred_check_branch
      %93 = sbr.rel (0) target = $region25
    $region24: #{tpu_custom_call.1} parent=1 // pred_region
      %94 = dma.done [#allocation4], 128
    $region25: #{tpu_custom_call.1} parent=1 // pred_fallthru
      _
    %95 = vsyncpa [#allocation3], 1
    %96 = vsyncpa [#allocation6], 1
    %97 = vsyncpa [#allocation4], 1

</llo_original>
